<compile_context>
chip_gen: v5e
topology: v5e:2x2
jax: 0.10.0
libtpu: 0.0.40
codegen_flags: <defaults>
</compile_context>

<pallas_src>
import jax
import jax.numpy as jnp
from jax.experimental import pallas as pl
from jax.experimental.pallas import tpu as pltpu

_LANE = 128
_SUBLANE = 8
_ROW_GRANULE = 16          # legal second-minor granule for both fp32 and bf16 blocks


def _round_up(x, m):
    return (x + m - 1) // m * m


def _cdiv(a, b):
    return (a + b - 1) // b


# ----------------------------------------------------------------------------
# Fused MLP kernel (built for a static layer count / activation pattern).
# ----------------------------------------------------------------------------
def _make_mlp_kernel(num_layers, bias_slices, apply_act):
    """refs layout: (x_ref, w_0 .. w_{L-1}, b_cat_ref, o_ref).

    bias_slices: static 128-aligned (lo, hi) lane slices into the concatenated
                 bias slab.
    apply_act:   tuple of bools; ReLU after layer l if True.
    """

    def kernel(*refs):
        x_ref = refs[0]
        w_refs = refs[1:1 + num_layers]
        b_ref = refs[1 + num_layers]
        o_ref = refs[2 + num_layers]

        h = x_ref[...]
        for l in range(num_layers):
            # MXU matmul in the weights' dtype (bf16 fast path on v6e/v7x),
            # fp32 accumulation via preferred_element_type.
            h = jnp.dot(h.astype(w_refs[l].dtype), w_refs[l][...],
                        preferred_element_type=jnp.float32)
            lo, hi = bias_slices[l]
            h = h + b_ref[:, lo:hi]          # fp32 bias add (VPU)
            if apply_act[l]:
                h = jnp.maximum(h, 0.0)      # fp32 ReLU (VPU)
        o_ref[...] = h.astype(o_ref.dtype)

    return kernel


# ----------------------------------------------------------------------------
# Wrapper: padding, tiling and the pallas_call.
# ----------------------------------------------------------------------------
def r_encoder_forward(xy_context, params, r_encoder_specs, *,
                      max_row_tile=2048, use_bf16=True, out_dtype=jnp.float32):
    """params: [(w_l, b_l)] with w_l shaped (in, out), b_l shaped (1, out).
    r_encoder_specs: [(out_dim, activation_or_None)].
    Returns (B, S, out_dim) in out_dtype (float32 default, bfloat16 optional)."""
    B, S, r_dim = xy_context.shape
    num_layers = len(params)
    assert num_layers == len(r_encoder_specs)

    store_dtype = jnp.dtype(out_dtype)
    assert store_dtype in (jnp.dtype(jnp.float32), jnp.dtype(jnp.bfloat16))

    apply_act = []
    for _out, act in r_encoder_specs:
        if act is None:
            apply_act.append(False)
        elif isinstance(act, str) and act.lower() == "relu":
            apply_act.append(True)
        else:
            # TODO(synk): only ReLU / identity activations are implemented.
            raise NotImplementedError(f"activation {act!r} not supported")
    apply_act = tuple(apply_act)

    compute_dtype = jnp.bfloat16 if use_bf16 else jnp.float32
    comp_bytes = jnp.dtype(compute_dtype).itemsize
    store_bytes = store_dtype.itemsize

    # ---- feature padding -----------------------------------------------------
    # Input K: pad only to the sublane granule (tiny -> tiny HBM stream).
    # Hidden / output dims: pad to 128 lanes (lane-dense vregs, unmasked stores).
    out_dims = [w.shape[1] for w, _b in params]
    p_in = _round_up(r_dim, _SUBLANE)
    p_out = [_round_up(d, _LANE) for d in out_dims]
    p_prev = [p_in] + p_out[:-1]

    w_pads = []
    b_chunks = []
    for l, (w, b) in enumerate(params):
        wp = jnp.zeros((p_prev[l], p_out[l]), jnp.float32)
        wp = wp.at[:w.shape[0], :w.shape[1]].set(w.astype(jnp.float32))
        w_pads.append(wp.astype(compute_dtype))        # zero rows/cols in padding
        bp = jnp.zeros((p_out[l],), jnp.float32)
        bp = bp.at[:b.shape[-1]].set(b.reshape(-1).astype(jnp.float32))
        b_chunks.append(bp)                             # zero bias in padded lanes
    b_cat = jnp.concatenate(b_chunks)[None, :]          # (1, sum(p_out)) fp32
    offs = [0]
    for p in p_out:
        offs.append(offs[-1] + p)
    bias_slices = tuple((offs[l], offs[l + 1]) for l in range(num_layers))

    # ---- row tiling ----------------------------------------------------------
    n_rows = B * S
    # Keep >= 2 grid steps so the "parallel" row axis can shard across v7x's
    # 2 TensorCores; round the tile to a 16-row granule (legal for fp32 & bf16).
    row_tile = min(max_row_tile, _round_up(_cdiv(n_rows, 2), _ROW_GRANULE))
    row_tile = max(_ROW_GRANULE, _round_up(row_tile, _ROW_GRANULE))
    n_pad = _round_up(n_rows, row_tile)

    # Build the padded x directly in the compute dtype (no fp32 HBM round trip).
    x = xy_context.reshape(n_rows, r_dim).astype(compute_dtype)
    xp = jnp.zeros((n_pad, p_in), compute_dtype).at[:n_rows, :r_dim].set(x)

    grid = (n_pad // row_tile,)

    in_specs = [pl.BlockSpec((row_tile, p_in), lambda i: (i, 0))]      # x rows
    for wp in w_pads:                                                  # weights (resident)
        in_specs.append(pl.BlockSpec(wp.shape, lambda i: (0, 0)))
    in_specs.append(pl.BlockSpec(b_cat.shape, lambda i: (0, 0)))       # biases (one slab)

    kernel = _make_mlp_kernel(num_layers, bias_slices, apply_act)

    # ---- VMEM budget / cost estimate -----------------------------------------
    w_bytes = sum(int(wp.size) for wp in w_pads) * comp_bytes
    b_bytes = int(b_cat.size) * 4
    tile_bytes = (2 * row_tile * p_in * comp_bytes            # x, double-buffered
                  + 2 * row_tile * p_out[-1] * store_bytes    # out, double-buffered
                  + 2 * (w_bytes + b_bytes)                   # weights/biases
                  + 4 * row_tile * max(p_out) * 4)            # fp32 intermediates headroom
    # Clamp to [32 MiB, 48 MiB]: above v5e's 16 MiB default scope, comfortably
    # inside v7x's 64 MiB physical VMEM.
    vmem_limit_bytes = int(min(48 << 20, max(32 << 20, 2 * tile_bytes)))

    real_dims = [r_dim] + out_dims
    flops = 2 * n_rows * sum(real_dims[l] * real_dims[l + 1]
                             for l in range(num_layers))
    bytes_accessed = int(n_pad * p_in * comp_bytes
                         + w_bytes + b_bytes
                         + n_pad * p_out[-1] * store_bytes)
    cost = pl.CostEstimate(flops=flops, transcendentals=0,
                           bytes_accessed=bytes_accessed)

    out = pl.pallas_call(
        kernel,
        out_shape=jax.ShapeDtypeStruct((n_pad, p_out[-1]), store_dtype),
        grid_spec=pltpu.PrefetchScalarGridSpec(
            num_scalar_prefetch=0,
            grid=grid,
            in_specs=in_specs,
            out_specs=pl.BlockSpec((row_tile, p_out[-1]), lambda i: (i, 0)),
        ),
        compiler_params=pltpu.CompilerParams(
            dimension_semantics=("parallel",),
            vmem_limit_bytes=vmem_limit_bytes),
        cost_estimate=cost,
    )(xp, *w_pads, b_cat)

    return out[:n_rows, :out_dims[-1]].reshape(B, S, out_dims[-1])


# ----------------------------------------------------------------------------
# Deterministic parameter construction (mirrors torch.nn.Linear + normal_ init)
# ----------------------------------------------------------------------------
def make_r_encoder_params(key, r_dim, r_encoder_specs):
    """Weights ~ N(0,1) like torch.nn.init.normal_; biases ~ U(-1/sqrt(fan_in),
    1/sqrt(fan_in)) like the default nn.Linear bias init. Weights are stored
    transposed to (in, out)."""
    params = []
    in_dim = r_dim
    for out_dim, _act in r_encoder_specs:
        key, wk, bk = jax.random.split(key, 3)
        w = jax.random.normal(wk, (in_dim, out_dim), dtype=jnp.float32)
        bound = 1.0 / jnp.sqrt(jnp.float32(in_dim))
        b = jax.random.uniform(bk, (1, out_dim), dtype=jnp.float32,
                               minval=-bound, maxval=bound)
        params.append((w, b))
        in_dim = out_dim
    return params


# Pure-JAX reference (semantics identical to the PyTorch forward pass).
# emulate_bf16=True rounds the matmul operands to bf16 (fp32 accumulation),
# matching the kernel's bf16 fast path.
def r_encoder_ref(xy_context, params, r_encoder_specs, *, emulate_bf16=False):
    r_i = xy_context.astype(jnp.float32)
    for (w, b), (_out, act) in zip(params, r_encoder_specs):
        lhs = r_i
        rhs = w.astype(jnp.float32)
        if emulate_bf16:
            lhs = lhs.astype(jnp.bfloat16).astype(jnp.float32)
            rhs = rhs.astype(jnp.bfloat16).astype(jnp.float32)
        r_i = jnp.dot(lhs, rhs, precision=jax.lax.Precision.HIGHEST) + b[0]
        if act:
            r_i = jnp.maximum(r_i, 0.0)
    return r_i


if __name__ == "__main__":
    # Module-consistent small shapes: r_dim = x_dim + y_dim = 6,
    # batch of 2 tasks with 8 context points each.
    B, S, r_dim = 2, 8, 6
    r_encoder_specs = [(32, "relu"), (32, "relu"), (64, None)]

    key = jax.random.PRNGKey(0)
    key, xk = jax.random.split(key)
    xy_context = jax.random.normal(xk, (B, S, r_dim), dtype=jnp.float32)
    params = make_r_encoder_params(key, r_dim, r_encoder_specs)

    # 1) fp32 path: tight check of kernel structure / lane+row padding.
    out_f32 = jax.block_until_ready(
        r_encoder_forward(xy_context, params, r_encoder_specs, use_bf16=False))
    ref_f32 = r_encoder_ref(xy_context, params, r_encoder_specs)
    assert out_f32.shape == (B, S, r_encoder_specs[-1][0])
    assert jnp.allclose(out_f32, ref_f32, atol=1e-2, rtol=1e-2), "fp32 mismatch"

    # 2) bf16 fast path (default, fp32 output store): compare against a
    #    bf16-emulating reference.
    out_bf16 = jax.block_until_ready(
        r_encoder_forward(xy_context, params, r_encoder_specs))
    ref_bf16 = r_encoder_ref(xy_context, params, r_encoder_specs,
                             emulate_bf16=True)
    assert jnp.allclose(out_bf16, ref_bf16, atol=2e-1, rtol=2e-2), "bf16 mismatch"

    # 3) rows not divisible by the tile, non-multiple-of-16 max_row_tile and a
    #    bf16 output store (exercises row zero-padding, defensive tile rounding,
    #    multi-step parallel row sharding and the bf16 store path).
    B2, S2 = 3, 50
    key, xk2 = jax.random.split(key)
    xy2 = jax.random.normal(xk2, (B2, S2, r_dim), dtype=jnp.float32)
    out2 = jax.block_until_ready(
        r_encoder_forward(xy2, params, r_encoder_specs,
                          max_row_tile=100, out_dtype=jnp.bfloat16))
    ref2 = r_encoder_ref(xy2, params, r_encoder_specs, emulate_bf16=True)
    assert out2.shape == (B2, S2, r_encoder_specs[-1][0])
    assert out2.dtype == jnp.bfloat16
    assert jnp.allclose(out2.astype(jnp.float32), ref2,
                        atol=5e-1, rtol=2e-2), "tiled bf16-out mismatch"

    print("KERNEL_OK")
</pallas_src>

<mosaic_0001>
module attributes {stable_mosaic.version = 11 : i64} {
  func.func @kernel(%arg0: i32, %arg1: memref<16x8xf32, #tpu.memory_space<vmem>>, %arg2: memref<8x128xf32, #tpu.memory_space<vmem>>, %arg3: memref<128x128xf32, #tpu.memory_space<vmem>>, %arg4: memref<128x128xf32, #tpu.memory_space<vmem>>, %arg5: memref<1x384xf32, #tpu.memory_space<vmem>>, %arg6: memref<16x128xf32, #tpu.memory_space<vmem>>) attributes {dimension_semantics = [#tpu.dimension_semantics<parallel>], iteration_bounds = array<i64: 1>, scalar_prefetch = 0 : i64, scratch_operands = 0 : i64, tpu.core_type = #tpu.core_type<tc>, window_params = [{transform_indices = @transform_0, window_bounds = array<i64: 16, 8>}, {pipeline_mode = #tpu.pipeline_mode<synchronous>, transform_indices = @transform_1, window_bounds = array<i64: 8, 128>}, {pipeline_mode = #tpu.pipeline_mode<synchronous>, transform_indices = @transform_2, window_bounds = array<i64: 128, 128>}, {pipeline_mode = #tpu.pipeline_mode<synchronous>, transform_indices = @transform_3, window_bounds = array<i64: 128, 128>}, {pipeline_mode = #tpu.pipeline_mode<synchronous>, transform_indices = @transform_4, window_bounds = array<i64: 1, 384>}, {transform_indices = @transform_5, window_bounds = array<i64: 16, 128>}]} {
    %c0 = arith.constant 0 : index
    %c0_0 = arith.constant 0 : index
    %0 = vector.load %arg1[%c0, %c0_0] : memref<16x8xf32, #tpu.memory_space<vmem>>, vector<16x8xf32>
    %c0_1 = arith.constant 0 : index
    %c0_2 = arith.constant 0 : index
    %1 = vector.load %arg2[%c0_1, %c0_2] : memref<8x128xf32, #tpu.memory_space<vmem>>, vector<8x128xf32>
    %cst = arith.constant dense<0.000000e+00> : vector<16x128xf32>
    %2 = tpu.matmul %0, %1, %cst {dimension_numbers = #tpu.dot_dimension_numbers<[1], [0], [0], [1], [0, 0, 1, 1], [], []>} : vector<16x8xf32>, vector<8x128xf32>, vector<16x128xf32> -> vector<16x128xf32>
    %c0_3 = arith.constant 0 : index
    %c0_4 = arith.constant 0 : index
    %3 = vector.load %arg5[%c0_3, %c0_4] : memref<1x384xf32, #tpu.memory_space<vmem>>, vector<1x128xf32>
    %4 = vector.broadcast %3 : vector<1x128xf32> to vector<16x128xf32>
    %5 = arith.addf %2, %4 : vector<16x128xf32>
    %cst_5 = arith.constant 0.000000e+00 : f32
    %6 = vector.broadcast %cst_5 : f32 to vector<16x128xf32>
    %7 = arith.maximumf %5, %6 : vector<16x128xf32>
    %c0_6 = arith.constant 0 : index
    %c0_7 = arith.constant 0 : index
    %8 = vector.load %arg3[%c0_6, %c0_7] : memref<128x128xf32, #tpu.memory_space<vmem>>, vector<128x128xf32>
    %cst_8 = arith.constant dense<0.000000e+00> : vector<16x128xf32>
    %9 = tpu.matmul %7, %8, %cst_8 {dimension_numbers = #tpu.dot_dimension_numbers<[1], [0], [0], [1], [0, 0, 1, 1], [], []>} : vector<16x128xf32>, vector<128x128xf32>, vector<16x128xf32> -> vector<16x128xf32>
    %c0_9 = arith.constant 0 : index
    %c128 = arith.constant 128 : index
    %10 = vector.load %arg5[%c0_9, %c128] : memref<1x384xf32, #tpu.memory_space<vmem>>, vector<1x128xf32>
    %11 = vector.broadcast %10 : vector<1x128xf32> to vector<16x128xf32>
    %12 = arith.addf %9, %11 : vector<16x128xf32>
    %cst_10 = arith.constant 0.000000e+00 : f32
    %13 = vector.broadcast %cst_10 : f32 to vector<16x128xf32>
    %14 = arith.maximumf %12, %13 : vector<16x128xf32>
    %c0_11 = arith.constant 0 : index
    %c0_12 = arith.constant 0 : index
    %15 = vector.load %arg4[%c0_11, %c0_12] : memref<128x128xf32, #tpu.memory_space<vmem>>, vector<128x128xf32>
    %cst_13 = arith.constant dense<0.000000e+00> : vector<16x128xf32>
    %16 = tpu.matmul %14, %15, %cst_13 {dimension_numbers = #tpu.dot_dimension_numbers<[1], [0], [0], [1], [0, 0, 1, 1], [], []>} : vector<16x128xf32>, vector<128x128xf32>, vector<16x128xf32> -> vector<16x128xf32>
    %c0_14 = arith.constant 0 : index
    %c256 = arith.constant 256 : index
    %17 = vector.load %arg5[%c0_14, %c256] : memref<1x384xf32, #tpu.memory_space<vmem>>, vector<1x128xf32>
    %18 = vector.broadcast %17 : vector<1x128xf32> to vector<16x128xf32>
    %19 = arith.addf %16, %18 : vector<16x128xf32>
    %c0_15 = arith.constant 0 : index
    %c0_16 = arith.constant 0 : index
    %20 = vector.load %arg6[%c0_15, %c0_16] : memref<16x128xf32, #tpu.memory_space<vmem>>, vector<16x128xf32>
    tpu.vector_store %arg6[%c0_15, %c0_16], %19 {strides = array<i32>} : memref<16x128xf32, #tpu.memory_space<vmem>>, vector<16x128xf32>,
    return
  }
  func.func @transform_0(%arg0: i32) -> (i32, i32) {
    %c0_i32 = arith.constant 0 : i32
    %c0_i32_0 = arith.constant 0 : i32
    return %arg0, %c0_i32 : i32, i32
  }
  func.func @transform_1(%arg0: i32) -> (i32, i32) {
    %c0_i32 = arith.constant 0 : i32
    %c0_i32_0 = arith.constant 0 : i32
    %c0_i32_1 = arith.constant 0 : i32
    return %c0_i32, %c0_i32_0 : i32, i32
  }
  func.func @transform_2(%arg0: i32) -> (i32, i32) {
    %c0_i32 = arith.constant 0 : i32
    %c0_i32_0 = arith.constant 0 : i32
    %c0_i32_1 = arith.constant 0 : i32
    return %c0_i32, %c0_i32_0 : i32, i32
  }
  func.func @transform_3(%arg0: i32) -> (i32, i32) {
    %c0_i32 = arith.constant 0 : i32
    %c0_i32_0 = arith.constant 0 : i32
    %c0_i32_1 = arith.constant 0 : i32
    return %c0_i32, %c0_i32_0 : i32, i32
  }
  func.func @transform_4(%arg0: i32) -> (i32, i32) {
    %c0_i32 = arith.constant 0 : i32
    %c0_i32_0 = arith.constant 0 : i32
    %c0_i32_1 = arith.constant 0 : i32
    return %c0_i32, %c0_i32_0 : i32, i32
  }
  func.func @transform_5(%arg0: i32) -> (i32, i32) {
    %c0_i32 = arith.constant 0 : i32
    %c0_i32_0 = arith.constant 0 : i32
    return %arg0, %c0_i32 : i32, i32
  }
}

</mosaic_0001>

<llo_original>
// kernel: tpu_custom_call.1
$region0: #{tpu_custom_call.1}
  #allocation0 [shape = 'u32[]', space=smem, size = 0x4, offset = 0x4, fixed_abs, tag = 'smem constant byte address 0x4 - core index']
  #allocation1 [shape = 'u32[72,128]{1,0:T(1,128)}', space=vmem, size = 0x9000, scoped, tag = 'internal scratch']
  %s0 = inlined_call_operand.vmem [shape: f32[16,8], index: 0, kind: input, shape index: {}]
  %s1 = inlined_call_operand.vmem [shape: f32[8,128], index: 1, kind: input, shape index: {}]
  %s2 = inlined_call_operand.hbm [shape: f32[128,128], index: 2, kind: input, shape index: {}]
  %s3 = inlined_call_operand.hbm [shape: f32[128,128], index: 3, kind: input, shape index: {}]
  %s4 = inlined_call_operand.vmem [shape: f32[1,384], index: 4, kind: input, shape index: {}]
  %s5 = inlined_call_operand.hbm [shape: f32[16,128], index: 5, kind: output, shape index: {}]
  %s6 = sld [smem:[#allocation0]]
  $region38: #{tpu_custom_call.1} parent=0
    _
  %s8 = ssub.s32 1, %s6
  %s9 = scalar_select 0, %s8, %s6
  $region1: #{tpu_custom_call.1} parent=0
    #allocation2 [shape = 'u8[65536]{0}', space=vmem, size = 0x10000, scoped, tag = 'input window, operand 2, single buffered']
    #allocation3 [shape = 's32[1]{0}', space=sflag, size = 0x4, scoped, tag = 'scoped memory for tpu_custom_call.1']
    #allocation4 [shape = 's32[1]{0}', space=sflag, size = 0x4, scoped, tag = 'scoped memory for tpu_custom_call.1']
    #allocation5 [shape = 'u8[65536]{0}', space=vmem, size = 0x10000, scoped, tag = 'input window, operand 3, single buffered']
    #allocation6 [shape = 's32[1]{0}', space=sflag, size = 0x4, scoped, tag = 'scoped memory for tpu_custom_call.1']
    #allocation7 [shape = 'u8[8192]{0}', space=vmem, size = 0x2000, scoped, tag = 'output window, operand 0, single buffered']
    %10 = vsyncpa [#allocation3], 0
    %11 = vsyncpa [#allocation6], 0
    %12 = vsyncpa [#allocation4], 0
    // Predicated region
    $region2: #{tpu_custom_call.1} parent=1 // pred_check
      _
    $region3: #{tpu_custom_call.1} parent=1 // pred_check_branch
      %14 = sbr.rel (0) target = $region5
    $region4: #{tpu_custom_call.1} parent=1 // pred_region
      _
    $region5: #{tpu_custom_call.1} parent=1 // pred_fallthru
      _
    // Predicated region
    $region6: #{tpu_custom_call.1} parent=1 // pred_check
      _
    $region7: #{tpu_custom_call.1} parent=1 // pred_check_branch
      %16 = sbr.rel (0) target = $region9
    $region8: #{tpu_custom_call.1} parent=1 // pred_region
      _
    $region9: #{tpu_custom_call.1} parent=1 // pred_fallthru
      _
    // Predicated region
    $region10: #{tpu_custom_call.1} parent=1 // pred_check
      _
    $region11: #{tpu_custom_call.1} parent=1 // pred_check_branch
      %18 = sbr.rel (0) target = $region13
    $region12: #{tpu_custom_call.1} parent=1 // pred_region
      %20 = vsyncadd [#allocation3], 0
      %s21 = sshll.u32 %s2, 4
      %s22 = int_to_ptr.hbm [resolvable:$true] %s21
      %s23 = sshll.u32 [#allocation2], 4
      %s24 = int_to_ptr.vmem [resolvable:$true] %s23
      %29 = dma.hbm_to_vmem [thread:$0]  %s22, 2048, %s24, [#allocation3], 128, 128, 8
    $region13: #{tpu_custom_call.1} parent=1 // pred_fallthru
      _
    // Predicated region
    $region14: #{tpu_custom_call.1} parent=1 // pred_check
      _
    $region15: #{tpu_custom_call.1} parent=1 // pred_check_branch
      %31 = sbr.rel (0) target = $region17
    $region16: #{tpu_custom_call.1} parent=1 // pred_region
      %33 = vsyncadd [#allocation6], 0
      %s34 = sshll.u32 %s3, 4
      %s35 = int_to_ptr.hbm [resolvable:$true] %s34
      %s36 = sshll.u32 [#allocation5], 4
      %s37 = int_to_ptr.vmem [resolvable:$true] %s36
      %42 = dma.hbm_to_vmem [thread:$0]  %s35, 2048, %s37, [#allocation6], 128, 128, 8
    $region17: #{tpu_custom_call.1} parent=1 // pred_fallthru
      _
    // Predicated region
    $region18: #{tpu_custom_call.1} parent=1 // pred_check
      _
    $region19: #{tpu_custom_call.1} parent=1 // pred_check_branch
      %44 = sbr.rel (0) target = $region21
    $region20: #{tpu_custom_call.1} parent=1 // pred_region
      _
    $region21: #{tpu_custom_call.1} parent=1 // pred_fallthru
      _
    // Predicated region
    $region22: #{tpu_custom_call.1} parent=1 // pred_check
      _
    $region23: #{tpu_custom_call.1} parent=1 // pred_check_branch
      %46 = sbr.rel (0) target = $region25
    $region24: #{tpu_custom_call.1} parent=1 // pred_region
      %48 = dma.done [#allocation3], 2048
    $region25: #{tpu_custom_call.1} parent=1 // pred_fallthru
      _
    // Predicated region
    $region26: #{tpu_custom_call.1} parent=1 // pred_check
      _
    $region27: #{tpu_custom_call.1} parent=1 // pred_check_branch
      %50 = sbr.rel (0) target = $region29
    $region28: #{tpu_custom_call.1} parent=1 // pred_region
      %52 = dma.done [#allocation6], 2048
    $region29: #{tpu_custom_call.1} parent=1 // pred_fallthru
      _
    %v53 = vld [vmem:[%s0] sm:$0xff]
    %v54 = vld [vmem:[%s0 + $0x8] sm:$0xff]
    %v55 = vld [vmem:[%s1] sm:$0xff]
    %v56 = vld [vmem:[%s4] sm:$0x1]
    %v58 = vperm.slane %v56, 0
    %vm60 = vcmask 64512
    %v62 = vsel %vm60, %v53, 0
    %v65 = vsel %vm60, %v54, 0
    %67 = vmatpush.msra.mxu0 0.0
    %68 = vmatpush.msra.mxu0 0.0
    %69 = vmatpush.msra.mxu0 0.0
    %70 = vmatpush.msra.mxu0 0.0
    %71 = vmatpush.msra.mxu0 0.0
    %72 = vmatpush.msra.mxu0 0.0
    %73 = vmatpush.msra.mxu0 0.0
    %74 = vmatpush.msra.mxu0 0.0
    %75 = vmatpush.msra.mxu0 0.0
    %76 = vmatpush.msra.mxu0 0.0
    %77 = vmatpush.msra.mxu0 0.0
    %78 = vmatpush.msra.mxu0 0.0
    %79 = vmatpush.msra.mxu0 0.0
    %80 = vmatpush.msra.mxu0 0.0
    %81 = vmatpush.msra.mxu0 0.0
    %82 = vmatpush.msra.mxu0 %v55
    %83 = vmatmul.f32.gmra.mxu0 %v62
    %v84 = vpop.f32.mrf.mxu0
    %v85 = vadd.f32 %v58, %v84
    %86 = vmatmul.f32.gmra.mxu0 %v65
    %v87 = vpop.f32.mrf.mxu0
    %v88 = vadd.f32 %v58, %v87
    %89 = vdwg.mxu0
    %v90 = vmax.f32 %v85, 0.0
    %v91 = vmax.f32 %v88, 0.0
    %v92 = vld [vmem:[#allocation2] sm:$0xff]
    %v93 = vld [vmem:[#allocation2 + $0x8] sm:$0xff]
    %v94 = vld [vmem:[#allocation2 + $0x10] sm:$0xff]
    %v95 = vld [vmem:[#allocation2 + $0x18] sm:$0xff]
    %v96 = vld [vmem:[#allocation2 + $0x20] sm:$0xff]
    %v97 = vld [vmem:[#allocation2 + $0x28] sm:$0xff]
    %v98 = vld [vmem:[#allocation2 + $0x30] sm:$0xff]
    %v99 = vld [vmem:[#allocation2 + $0x38] sm:$0xff]
    %v100 = vld [vmem:[#allocation2 + $0x40] sm:$0xff]
    %v101 = vld [vmem:[#allocation2 + $0x48] sm:$0xff]
    %v102 = vld [vmem:[#allocation2 + $0x50] sm:$0xff]
    %v103 = vld [vmem:[#allocation2 + $0x58] sm:$0xff]
    %v104 = vld [vmem:[#allocation2 + $0x60] sm:$0xff]
    %v105 = vld [vmem:[#allocation2 + $0x68] sm:$0xff]
    %v106 = vld [vmem:[#allocation2 + $0x70] sm:$0xff]
    %v107 = vld [vmem:[#allocation2 + $0x78] sm:$0xff]
    %v108 = vld [vmem:[%s4 + $0x1] sm:$0x1]
    %v110 = vperm.slane %v108, 0
    %112 = vmatpush.msra.mxu0 %v107
    %113 = vmatpush.msra.mxu0 %v106
    %114 = vmatpush.msra.mxu0 %v105
    %115 = vmatpush.msra.mxu0 %v104
    %116 = vmatpush.msra.mxu0 %v103
    %117 = vmatpush.msra.mxu0 %v102
    %118 = vmatpush.msra.mxu0 %v101
    %119 = vmatpush.msra.mxu0 %v100
    %120 = vmatpush.msra.mxu0 %v99
    %121 = vmatpush.msra.mxu0 %v98
    %122 = vmatpush.msra.mxu0 %v97
    %123 = vmatpush.msra.mxu0 %v96
    %124 = vmatpush.msra.mxu0 %v95
    %125 = vmatpush.msra.mxu0 %v94
    %126 = vmatpush.msra.mxu0 %v93
    %127 = vmatpush.msra.mxu0 %v92
    %128 = vmatmul.f32.gmra.mxu0 %v90
    %v129 = vpop.f32.mrf.mxu0
    %v130 = vadd.f32 %v110, %v129
    %131 = vmatmul.f32.gmra.mxu0 %v91
    %v132 = vpop.f32.mrf.mxu0
    %v133 = vadd.f32 %v110, %v132
    %134 = vdwg.mxu0
    %v135 = vmax.f32 %v130, 0.0
    %v136 = vmax.f32 %v133, 0.0
    %v137 = vld [vmem:[#allocation5] sm:$0xff]
    %v138 = vld [vmem:[#allocation5 + $0x8] sm:$0xff]
    %v139 = vld [vmem:[#allocation5 + $0x10] sm:$0xff]
    %v140 = vld [vmem:[#allocation5 + $0x18] sm:$0xff]
    %v141 = vld [vmem:[#allocation5 + $0x20] sm:$0xff]
    %v142 = vld [vmem:[#allocation5 + $0x28] sm:$0xff]
    %v143 = vld [vmem:[#allocation5 + $0x30] sm:$0xff]
    %v144 = vld [vmem:[#allocation5 + $0x38] sm:$0xff]
    %v145 = vld [vmem:[#allocation5 + $0x40] sm:$0xff]
    %v146 = vld [vmem:[#allocation5 + $0x48] sm:$0xff]
    %v147 = vld [vmem:[#allocation5 + $0x50] sm:$0xff]
    %v148 = vld [vmem:[#allocation5 + $0x58] sm:$0xff]
    %v149 = vld [vmem:[#allocation5 + $0x60] sm:$0xff]
    %v150 = vld [vmem:[#allocation5 + $0x68] sm:$0xff]
    %v151 = vld [vmem:[#allocation5 + $0x70] sm:$0xff]
    %v152 = vld [vmem:[#allocation5 + $0x78] sm:$0xff]
    %v153 = vld [vmem:[%s4 + $0x2] sm:$0x1]
    %v155 = vperm.slane %v153, 0
    %157 = vmatpush.msra.mxu0 %v152
    %158 = vmatpush.msra.mxu0 %v151
    %159 = vmatpush.msra.mxu0 %v150
    %160 = vmatpush.msra.mxu0 %v149
    %161 = vmatpush.msra.mxu0 %v148
    %162 = vmatpush.msra.mxu0 %v147
    %163 = vmatpush.msra.mxu0 %v146
    %164 = vmatpush.msra.mxu0 %v145
    %165 = vmatpush.msra.mxu0 %v144
    %166 = vmatpush.msra.mxu0 %v143
    %167 = vmatpush.msra.mxu0 %v142
    %168 = vmatpush.msra.mxu0 %v141
    %169 = vmatpush.msra.mxu0 %v140
    %170 = vmatpush.msra.mxu0 %v139
    %171 = vmatpush.msra.mxu0 %v138
    %172 = vmatpush.msra.mxu0 %v137
    %173 = vmatmul.f32.gmra.mxu0 %v135
    %v174 = vpop.f32.mrf.mxu0
    %v175 = vadd.f32 %v155, %v174
    %176 = vmatmul.f32.gmra.mxu0 %v136
    %v177 = vpop.f32.mrf.mxu0
    %v178 = vadd.f32 %v155, %v177
    %179 = vdwg.mxu0
    %180 = vst [vmem:[#allocation7] sm:$0xff] %v175
    %181 = vst [vmem:[#allocation7 + $0x8] sm:$0xff] %v178
    // Predicated region
    $region30: #{tpu_custom_call.1} parent=1 // pred_check
      _
    $region31: #{tpu_custom_call.1} parent=1 // pred_check_branch
      %183 = sbr.rel (0) target = $region33
    $region32: #{tpu_custom_call.1} parent=1 // pred_region
      %185 = vsyncadd [#allocation4], 0
      %s186 = sshll.u32 [#allocation7], 4
      %s187 = int_to_ptr.vmem [resolvable:$true] %s186
      %s188 = sshll.u32 %s5, 4
      %s189 = int_to_ptr.hbm [resolvable:$true] %s188
      %194 = dma.vmem_to_hbm [thread:$0]  %s187, 256, %s189, [#allocation4], 128, 128, 8
    $region33: #{tpu_custom_call.1} parent=1 // pred_fallthru
      _
    // Predicated region
    $region34: #{tpu_custom_call.1} parent=1 // pred_check
      _
    $region35: #{tpu_custom_call.1} parent=1 // pred_check_branch
      %196 = sbr.rel (0) target = $region37
    $region36: #{tpu_custom_call.1} parent=1 // pred_region
      %198 = dma.done [#allocation4], 256
    $region37: #{tpu_custom_call.1} parent=1 // pred_fallthru
      _
    %199 = vsyncpa [#allocation3], 1
    %200 = vsyncpa [#allocation6], 1
    %201 = vsyncpa [#allocation4], 1

</llo_original>
